<compile_context>
chip_gen: v6e
topology: v6e:2x2x1
jax: 0.10.0
libtpu: 0.0.40
codegen_flags: <defaults>
</compile_context>

<pallas_src>
import functools

import jax
import jax.numpy as jnp
from jax import lax
from jax.experimental import pallas as pl
from jax.experimental.pallas import tpu as pltpu

BN_EPS = 1e-5


# ----------------------------- Pallas kernel -------------------------------

def _act(name, x):
    if name == "relu":
        return jnp.maximum(x, 0.0)
    if name == "sigmoid":
        return jax.nn.sigmoid(x)
    raise ValueError(name)


def _round_up(x, m):
    return (x + m - 1) // m * m


def make_fused_kernel(stage1_widths, stage1_acts, stage2_widths, stage2_acts):
    """Fused kernel: stage-1 (block-diagonal shared MLP) + stage-2 fc chain.

    Ref order: x, w_0..w_{L-1}, T_0..T_{n1-1}, gamma/beta slab, out.
    stage1_widths[i] = n_feat * d_i (tiled width), stage2_widths[j] = d_j
    (last one lane-padded to a multiple of 128).
    """
    n1 = len(stage1_widths)
    n2 = len(stage2_widths)
    n_layers = n1 + n2

    def kernel(*refs):
        x_ref = refs[0]
        w_refs = refs[1:1 + n_layers]
        t_refs = refs[1 + n_layers:1 + n_layers + n1]
        slab_ref = refs[1 + n_layers + n1]
        out_ref = refs[-1]

        h = x_ref[...].astype(jnp.float32)

        # ---- stage 1: shared per-group MLP as block-diagonal matmuls ----
        # BN stats are pooled over batch rows AND the n_feat column groups
        # (== batch stats of the original (B*n_feat, d) layout) via the
        # group-averaging matrix T.  Linear bias omitted (cancels under BN).
        for i in range(n1):
            w = w_refs[i][...]
            t = t_refs[i][...]
            wd = stage1_widths[i]
            y = jnp.dot(h, w, preferred_element_type=jnp.float32)
            col_mean = jnp.mean(y, axis=0, keepdims=True)
            m = jnp.dot(col_mean, t, preferred_element_type=jnp.float32)
            c = y - m
            col_var = jnp.mean(c * c, axis=0, keepdims=True)
            v = jnp.dot(col_var, t, preferred_element_type=jnp.float32)
            g = slab_ref[2 * i:2 * i + 1, 0:wd]
            b = slab_ref[2 * i + 1:2 * i + 2, 0:wd]
            h = _act(stage1_acts[i], c * lax.rsqrt(v + BN_EPS) * g + b)

        # h is now (B, n_feat * features_out_size) == stage-2 input layout.

        # ---- stage 2: Linear -> BN(batch stats) -> activation chain ----
        # (dropout after the first fc layer is identity in eval mode)
        for j in range(n2):
            li = n1 + j
            w = w_refs[li][...]
            wd = stage2_widths[j]
            y = jnp.dot(h, w, preferred_element_type=jnp.float32)
            m = jnp.mean(y, axis=0, keepdims=True)
            c = y - m
            v = jnp.mean(c * c, axis=0, keepdims=True)
            g = slab_ref[2 * li:2 * li + 1, 0:wd]
            b = slab_ref[2 * li + 1:2 * li + 2, 0:wd]
            h = _act(stage2_acts[j], c * lax.rsqrt(v + BN_EPS) * g + b)

        out_ref[...] = h.astype(out_ref.dtype)

    return kernel


# --------------------------- model construction ----------------------------

def init_linear(key, in_dim, out_dim):
    """Deterministic Linear + BatchNorm1d params (PyTorch-like init)."""
    kw, kb = jax.random.split(key)
    bound = 1.0 / jnp.sqrt(jnp.float32(in_dim))
    w = jax.random.uniform(kw, (in_dim, out_dim), jnp.float32, -bound, bound)
    b = jax.random.uniform(kb, (out_dim,), jnp.float32, -bound, bound)
    gamma = jnp.ones((out_dim,), jnp.float32)
    beta = jnp.zeros((out_dim,), jnp.float32)
    return (w, b, gamma, beta)


def build_params(key, sizes):
    layers = []
    for i in range(1, len(sizes)):
        key, sub = jax.random.split(key)
        layers.append(init_linear(sub, sizes[i - 1], sizes[i]))
    return key, layers


@functools.partial(jax.jit, static_argnames=("features_size", "features_out_size"))
def solution_model_forward(data, first_layers, fc_layers,
                           features_size, features_out_size):
    """Full SolutionModel forward as ONE fused Pallas kernel."""
    B, in_size = data.shape
    n_feat = in_size // features_size
    output_size = fc_layers[-1][0].shape[1]
    out_pad = _round_up(output_size, 128)

    stage1_acts = tuple(["relu"] * (len(first_layers) - 1) + ["sigmoid"])
    stage2_acts = tuple(["sigmoid"] + ["relu"] * (len(fc_layers) - 2) + ["sigmoid"])

    eye_nf = jnp.eye(n_feat, dtype=jnp.float32)
    pool = jnp.full((n_feat, n_feat), 1.0 / n_feat, dtype=jnp.float32)

    w_list, t_list, slab_rows = [], [], []
    stage1_widths, stage2_widths = [], []

    # stage 1: block-diagonal weights + group-average matrices + tiled BN params
    for (w, _b, gamma, beta) in first_layers:      # bias dropped (exact under BN)
        d = w.shape[1]
        stage1_widths.append(n_feat * d)
        w_list.append(jnp.kron(eye_nf, w))                         # (nf*in, nf*d)
        t_list.append(jnp.kron(pool, jnp.eye(d, dtype=jnp.float32)))
        slab_rows.append(jnp.tile(gamma, n_feat))
        slab_rows.append(jnp.tile(beta, n_feat))

    # stage 2: plain weights; last layer zero-padded to a lane-dense width
    for li, (w, _b, gamma, beta) in enumerate(fc_layers):
        d = w.shape[1]
        if li == len(fc_layers) - 1 and d < out_pad:
            w = jnp.pad(w, ((0, 0), (0, out_pad - d)))
            gamma = jnp.pad(gamma, (0, out_pad - d), constant_values=1.0)
            beta = jnp.pad(beta, (0, out_pad - d))
            d = out_pad
        stage2_widths.append(d)
        w_list.append(w)
        slab_rows.append(gamma)
        slab_rows.append(beta)

    # pack all gamma/beta rows into one (2*L, max_w) slab -> single VMEM ref
    max_w = _round_up(max(stage1_widths + stage2_widths), 128)
    slab = jnp.stack([jnp.pad(r, (0, max_w - r.shape[0])) for r in slab_rows])

    kernel = make_fused_kernel(tuple(stage1_widths), stage1_acts,
                               tuple(stage2_widths), stage2_acts)

    n_in = 1 + len(w_list) + len(t_list) + 1
    vmem = pl.BlockSpec(memory_space=pltpu.MemorySpace.VMEM)
    out = pl.pallas_call(
        kernel,
        out_shape=jax.ShapeDtypeStruct((B, out_pad), jnp.float32),
        in_specs=[vmem] * n_in,
        out_specs=vmem,
        compiler_params=pltpu.CompilerParams(vmem_limit_bytes=32 * 1024 * 1024),
    )(data, *w_list, *t_list, slab)

    return out[:, :output_size]


# ----------------------------- pure-JAX reference ---------------------------

def mlp_ref(x, layers, act_names):
    h = x
    for (w, b, g, be), a in zip(layers, act_names):
        y = h @ w + b
        mean = jnp.mean(y, axis=0, keepdims=True)
        var = jnp.mean((y - mean) ** 2, axis=0, keepdims=True)
        y = (y - mean) / jnp.sqrt(var + BN_EPS) * g + be
        h = jnp.maximum(y, 0.0) if a == "relu" else jax.nn.sigmoid(y)
    return h


def forward_ref(data, first_layers, fc_layers, features_size, features_out_size):
    B, in_size = data.shape
    n_feat = in_size // features_size
    acts1 = ["relu"] * (len(first_layers) - 1) + ["sigmoid"]
    o1 = mlp_ref(data.reshape(B * n_feat, features_size), first_layers, acts1)
    acts2 = ["sigmoid"] + ["relu"] * (len(fc_layers) - 2) + ["sigmoid"]
    return mlp_ref(o1.reshape(B, n_feat * features_out_size), fc_layers, acts2)


# ---------------------------------- main ------------------------------------

if __name__ == "__main__":
    # hyper-params (what params.* would carry)
    batch = 16
    input_size = 64           # e.g. 8 voters x 8 features
    output_size = 1
    features_size = 8
    features_out_size = 4
    hidden_sizes1 = [16]      # first model hidden
    hidden_sizes = [32, 16]   # outer fc hidden

    self_input_size = input_size // features_size * features_out_size  # 32

    key = jax.random.PRNGKey(0)
    key, kx = jax.random.split(key)
    data = jax.random.uniform(kx, (batch, input_size), jnp.float32)

    # first model params: features_size -> hidden_sizes1 -> features_out_size
    key, first_layers = build_params(
        key, (features_size, *hidden_sizes1, features_out_size))
    # outer fc params: self_input_size -> hidden_sizes -> output_size
    key, fc_layers = build_params(
        key, (self_input_size, *hidden_sizes, output_size))

    out = solution_model_forward(
        data, first_layers, fc_layers,
        features_size=features_size, features_out_size=features_out_size)
    out = jax.block_until_ready(out)

    ref = forward_ref(data, first_layers, fc_layers,
                      features_size, features_out_size)
    assert out.shape == (batch, output_size), out.shape
    assert jnp.allclose(out, ref, atol=1e-4, rtol=1e-4), (
        float(jnp.max(jnp.abs(out - ref))))

    print("KERNEL_OK")
</pallas_src>

<mosaic_0001>
module attributes {stable_mosaic.version = 11 : i64} {
  func.func @kernel(%arg0: memref<16x64xf32, #tpu.memory_space<vmem>>, %arg1: memref<64x128xf32, #tpu.memory_space<vmem>>, %arg2: memref<128x32xf32, #tpu.memory_space<vmem>>, %arg3: memref<32x32xf32, #tpu.memory_space<vmem>>, %arg4: memref<32x16xf32, #tpu.memory_space<vmem>>, %arg5: memref<16x128xf32, #tpu.memory_space<vmem>>, %arg6: memref<128x128xf32, #tpu.memory_space<vmem>>, %arg7: memref<32x32xf32, #tpu.memory_space<vmem>>, %arg8: memref<10x128xf32, #tpu.memory_space<vmem>>, %arg9: memref<16x128xf32, #tpu.memory_space<vmem>>) attributes {dimension_semantics = [], scalar_prefetch = 0 : i64, scratch_operands = 0 : i64, tpu.core_type = #tpu.core_type<tc>} {
    %c0 = arith.constant 0 : index
    %c0_0 = arith.constant 0 : index
    %0 = vector.load %arg0[%c0, %c0_0] : memref<16x64xf32, #tpu.memory_space<vmem>>, vector<16x64xf32>
    %c0_1 = arith.constant 0 : index
    %c0_2 = arith.constant 0 : index
    %1 = vector.load %arg1[%c0_1, %c0_2] : memref<64x128xf32, #tpu.memory_space<vmem>>, vector<64x128xf32>
    %c0_3 = arith.constant 0 : index
    %c0_4 = arith.constant 0 : index
    %2 = vector.load %arg6[%c0_3, %c0_4] : memref<128x128xf32, #tpu.memory_space<vmem>>, vector<128x128xf32>
    %cst = arith.constant dense<0.000000e+00> : vector<16x128xf32>
    %3 = tpu.matmul %0, %1, %cst {dimension_numbers = #tpu.dot_dimension_numbers<[1], [0], [0], [1], [0, 0, 1, 1], [], []>} : vector<16x64xf32>, vector<64x128xf32>, vector<16x128xf32> -> vector<16x128xf32>
    %cst_5 = arith.constant dense<0.000000e+00> : vector<128xf32>
    %4 = vector.multi_reduction <add>, %3, %cst_5 [0] : vector<16x128xf32> to vector<128xf32>
    %5 = vector.shape_cast %4 : vector<128xf32> to vector<1x128xf32>
    %cst_6 = arith.constant 1.600000e+01 : f32
    %6 = vector.broadcast %cst_6 : f32 to vector<1x128xf32>
    %7 = arith.divf %5, %6 : vector<1x128xf32>
    %cst_7 = arith.constant dense<0.000000e+00> : vector<1x128xf32>
    %8 = tpu.matmul %7, %2, %cst_7 {dimension_numbers = #tpu.dot_dimension_numbers<[1], [0], [0], [1], [0, 0, 1, 1], [], []>} : vector<1x128xf32>, vector<128x128xf32>, vector<1x128xf32> -> vector<1x128xf32>
    %9 = vector.broadcast %8 : vector<1x128xf32> to vector<16x128xf32>
    %10 = arith.subf %3, %9 : vector<16x128xf32>
    %11 = arith.mulf %10, %10 : vector<16x128xf32>
    %cst_8 = arith.constant dense<0.000000e+00> : vector<128xf32>
    %12 = vector.multi_reduction <add>, %11, %cst_8 [0] : vector<16x128xf32> to vector<128xf32>
    %13 = vector.shape_cast %12 : vector<128xf32> to vector<1x128xf32>
    %cst_9 = arith.constant 1.600000e+01 : f32
    %14 = vector.broadcast %cst_9 : f32 to vector<1x128xf32>
    %15 = arith.divf %13, %14 : vector<1x128xf32>
    %cst_10 = arith.constant dense<0.000000e+00> : vector<1x128xf32>
    %16 = tpu.matmul %15, %2, %cst_10 {dimension_numbers = #tpu.dot_dimension_numbers<[1], [0], [0], [1], [0, 0, 1, 1], [], []>} : vector<1x128xf32>, vector<128x128xf32>, vector<1x128xf32> -> vector<1x128xf32>
    %c0_11 = arith.constant 0 : index
    %c0_12 = arith.constant 0 : index
    %17 = vector.load %arg8[%c0_11, %c0_12] : memref<10x128xf32, #tpu.memory_space<vmem>>, vector<1x128xf32>
    %c1 = arith.constant 1 : index
    %c0_13 = arith.constant 0 : index
    %18 = vector.load %arg8[%c1, %c0_13] : memref<10x128xf32, #tpu.memory_space<vmem>>, vector<1x128xf32>
    %cst_14 = arith.constant 9.99999974E-6 : f32
    %19 = vector.broadcast %cst_14 : f32 to vector<1x128xf32>
    %20 = arith.addf %16, %19 : vector<1x128xf32>
    %21 = math.rsqrt %20 : vector<1x128xf32>
    %22 = vector.broadcast %21 : vector<1x128xf32> to vector<16x128xf32>
    %23 = arith.mulf %10, %22 : vector<16x128xf32>
    %24 = vector.broadcast %17 : vector<1x128xf32> to vector<16x128xf32>
    %25 = arith.mulf %23, %24 : vector<16x128xf32>
    %26 = vector.broadcast %18 : vector<1x128xf32> to vector<16x128xf32>
    %27 = arith.addf %25, %26 : vector<16x128xf32>
    %cst_15 = arith.constant 0.000000e+00 : f32
    %28 = vector.broadcast %cst_15 : f32 to vector<16x128xf32>
    %29 = arith.maximumf %27, %28 : vector<16x128xf32>
    %c0_16 = arith.constant 0 : index
    %c0_17 = arith.constant 0 : index
    %30 = vector.load %arg2[%c0_16, %c0_17] : memref<128x32xf32, #tpu.memory_space<vmem>>, vector<128x32xf32>
    %c0_18 = arith.constant 0 : index
    %c0_19 = arith.constant 0 : index
    %31 = vector.load %arg7[%c0_18, %c0_19] : memref<32x32xf32, #tpu.memory_space<vmem>>, vector<32x32xf32>
    %cst_20 = arith.constant dense<0.000000e+00> : vector<16x32xf32>
    %32 = tpu.matmul %29, %30, %cst_20 {dimension_numbers = #tpu.dot_dimension_numbers<[1], [0], [0], [1], [0, 0, 1, 1], [], []>} : vector<16x128xf32>, vector<128x32xf32>, vector<16x32xf32> -> vector<16x32xf32>
    %cst_21 = arith.constant dense<0.000000e+00> : vector<32xf32>
    %33 = vector.multi_reduction <add>, %32, %cst_21 [0] : vector<16x32xf32> to vector<32xf32>
    %34 = vector.shape_cast %33 : vector<32xf32> to vector<1x32xf32>
    %cst_22 = arith.constant 1.600000e+01 : f32
    %35 = vector.broadcast %cst_22 : f32 to vector<1x32xf32>
    %36 = arith.divf %34, %35 : vector<1x32xf32>
    %cst_23 = arith.constant dense<0.000000e+00> : vector<1x32xf32>
    %37 = tpu.matmul %36, %31, %cst_23 {dimension_numbers = #tpu.dot_dimension_numbers<[1], [0], [0], [1], [0, 0, 1, 1], [], []>} : vector<1x32xf32>, vector<32x32xf32>, vector<1x32xf32> -> vector<1x32xf32>
    %38 = vector.broadcast %37 : vector<1x32xf32> to vector<16x32xf32>
    %39 = arith.subf %32, %38 : vector<16x32xf32>
    %40 = arith.mulf %39, %39 : vector<16x32xf32>
    %cst_24 = arith.constant dense<0.000000e+00> : vector<32xf32>
    %41 = vector.multi_reduction <add>, %40, %cst_24 [0] : vector<16x32xf32> to vector<32xf32>
    %42 = vector.shape_cast %41 : vector<32xf32> to vector<1x32xf32>
    %cst_25 = arith.constant 1.600000e+01 : f32
    %43 = vector.broadcast %cst_25 : f32 to vector<1x32xf32>
    %44 = arith.divf %42, %43 : vector<1x32xf32>
    %cst_26 = arith.constant dense<0.000000e+00> : vector<1x32xf32>
    %45 = tpu.matmul %44, %31, %cst_26 {dimension_numbers = #tpu.dot_dimension_numbers<[1], [0], [0], [1], [0, 0, 1, 1], [], []>} : vector<1x32xf32>, vector<32x32xf32>, vector<1x32xf32> -> vector<1x32xf32>
    %c2 = arith.constant 2 : index
    %c0_27 = arith.constant 0 : index
    %46 = vector.load %arg8[%c2, %c0_27] : memref<10x128xf32, #tpu.memory_space<vmem>>, vector<1x32xf32>
    %c3 = arith.constant 3 : index
    %c0_28 = arith.constant 0 : index
    %47 = vector.load %arg8[%c3, %c0_28] : memref<10x128xf32, #tpu.memory_space<vmem>>, vector<1x32xf32>
    %cst_29 = arith.constant 9.99999974E-6 : f32
    %48 = vector.broadcast %cst_29 : f32 to vector<1x32xf32>
    %49 = arith.addf %45, %48 : vector<1x32xf32>
    %50 = math.rsqrt %49 : vector<1x32xf32>
    %51 = vector.broadcast %50 : vector<1x32xf32> to vector<16x32xf32>
    %52 = arith.mulf %39, %51 : vector<16x32xf32>
    %53 = vector.broadcast %46 : vector<1x32xf32> to vector<16x32xf32>
    %54 = arith.mulf %52, %53 : vector<16x32xf32>
    %55 = vector.broadcast %47 : vector<1x32xf32> to vector<16x32xf32>
    %56 = arith.addf %54, %55 : vector<16x32xf32>
    %57 = arith.negf %56 : vector<16x32xf32>
    %58 = math.exp %57 : vector<16x32xf32>
    %cst_30 = arith.constant 1.000000e+00 : f32
    %59 = vector.broadcast %cst_30 : f32 to vector<16x32xf32>
    %60 = arith.addf %59, %58 : vector<16x32xf32>
    %61 = arith.divf %59, %60 : vector<16x32xf32>
    %c0_31 = arith.constant 0 : index
    %c0_32 = arith.constant 0 : index
    %62 = vector.load %arg3[%c0_31, %c0_32] : memref<32x32xf32, #tpu.memory_space<vmem>>, vector<32x32xf32>
    %cst_33 = arith.constant dense<0.000000e+00> : vector<16x32xf32>
    %63 = tpu.matmul %61, %62, %cst_33 {dimension_numbers = #tpu.dot_dimension_numbers<[1], [0], [0], [1], [0, 0, 1, 1], [], []>} : vector<16x32xf32>, vector<32x32xf32>, vector<16x32xf32> -> vector<16x32xf32>
    %cst_34 = arith.constant dense<0.000000e+00> : vector<32xf32>
    %64 = vector.multi_reduction <add>, %63, %cst_34 [0] : vector<16x32xf32> to vector<32xf32>
    %65 = vector.shape_cast %64 : vector<32xf32> to vector<1x32xf32>
    %cst_35 = arith.constant 1.600000e+01 : f32
    %66 = vector.broadcast %cst_35 : f32 to vector<1x32xf32>
    %67 = arith.divf %65, %66 : vector<1x32xf32>
    %68 = vector.broadcast %67 : vector<1x32xf32> to vector<16x32xf32>
    %69 = arith.subf %63, %68 : vector<16x32xf32>
    %70 = arith.mulf %69, %69 : vector<16x32xf32>
    %cst_36 = arith.constant dense<0.000000e+00> : vector<32xf32>
    %71 = vector.multi_reduction <add>, %70, %cst_36 [0] : vector<16x32xf32> to vector<32xf32>
    %72 = vector.shape_cast %71 : vector<32xf32> to vector<1x32xf32>
    %cst_37 = arith.constant 1.600000e+01 : f32
    %73 = vector.broadcast %cst_37 : f32 to vector<1x32xf32>
    %74 = arith.divf %72, %73 : vector<1x32xf32>
    %c4 = arith.constant 4 : index
    %c0_38 = arith.constant 0 : index
    %75 = vector.load %arg8[%c4, %c0_38] : memref<10x128xf32, #tpu.memory_space<vmem>>, vector<1x32xf32>
    %c5 = arith.constant 5 : index
    %c0_39 = arith.constant 0 : index
    %76 = vector.load %arg8[%c5, %c0_39] : memref<10x128xf32, #tpu.memory_space<vmem>>, vector<1x32xf32>
    %cst_40 = arith.constant 9.99999974E-6 : f32
    %77 = vector.broadcast %cst_40 : f32 to vector<1x32xf32>
    %78 = arith.addf %74, %77 : vector<1x32xf32>
    %79 = math.rsqrt %78 : vector<1x32xf32>
    %80 = vector.broadcast %79 : vector<1x32xf32> to vector<16x32xf32>
    %81 = arith.mulf %69, %80 : vector<16x32xf32>
    %82 = vector.broadcast %75 : vector<1x32xf32> to vector<16x32xf32>
    %83 = arith.mulf %81, %82 : vector<16x32xf32>
    %84 = vector.broadcast %76 : vector<1x32xf32> to vector<16x32xf32>
    %85 = arith.addf %83, %84 : vector<16x32xf32>
    %86 = arith.negf %85 : vector<16x32xf32>
    %87 = math.exp %86 : vector<16x32xf32>
    %cst_41 = arith.constant 1.000000e+00 : f32
    %88 = vector.broadcast %cst_41 : f32 to vector<16x32xf32>
    %89 = arith.addf %88, %87 : vector<16x32xf32>
    %90 = arith.divf %88, %89 : vector<16x32xf32>
    %c0_42 = arith.constant 0 : index
    %c0_43 = arith.constant 0 : index
    %91 = vector.load %arg4[%c0_42, %c0_43] : memref<32x16xf32, #tpu.memory_space<vmem>>, vector<32x16xf32>
    %cst_44 = arith.constant dense<0.000000e+00> : vector<16x16xf32>
    %92 = tpu.matmul %90, %91, %cst_44 {dimension_numbers = #tpu.dot_dimension_numbers<[1], [0], [0], [1], [0, 0, 1, 1], [], []>} : vector<16x32xf32>, vector<32x16xf32>, vector<16x16xf32> -> vector<16x16xf32>
    %cst_45 = arith.constant dense<0.000000e+00> : vector<16xf32>
    %93 = vector.multi_reduction <add>, %92, %cst_45 [0] : vector<16x16xf32> to vector<16xf32>
    %94 = vector.shape_cast %93 : vector<16xf32> to vector<1x16xf32>
    %cst_46 = arith.constant 1.600000e+01 : f32
    %95 = vector.broadcast %cst_46 : f32 to vector<1x16xf32>
    %96 = arith.divf %94, %95 : vector<1x16xf32>
    %97 = vector.broadcast %96 : vector<1x16xf32> to vector<16x16xf32>
    %98 = arith.subf %92, %97 : vector<16x16xf32>
    %99 = arith.mulf %98, %98 : vector<16x16xf32>
    %cst_47 = arith.constant dense<0.000000e+00> : vector<16xf32>
    %100 = vector.multi_reduction <add>, %99, %cst_47 [0] : vector<16x16xf32> to vector<16xf32>
    %101 = vector.shape_cast %100 : vector<16xf32> to vector<1x16xf32>
    %cst_48 = arith.constant 1.600000e+01 : f32
    %102 = vector.broadcast %cst_48 : f32 to vector<1x16xf32>
    %103 = arith.divf %101, %102 : vector<1x16xf32>
    %c6 = arith.constant 6 : index
    %c0_49 = arith.constant 0 : index
    %104 = vector.load %arg8[%c6, %c0_49] : memref<10x128xf32, #tpu.memory_space<vmem>>, vector<1x16xf32>
    %c7 = arith.constant 7 : index
    %c0_50 = arith.constant 0 : index
    %105 = vector.load %arg8[%c7, %c0_50] : memref<10x128xf32, #tpu.memory_space<vmem>>, vector<1x16xf32>
    %cst_51 = arith.constant 9.99999974E-6 : f32
    %106 = vector.broadcast %cst_51 : f32 to vector<1x16xf32>
    %107 = arith.addf %103, %106 : vector<1x16xf32>
    %108 = math.rsqrt %107 : vector<1x16xf32>
    %109 = vector.broadcast %108 : vector<1x16xf32> to vector<16x16xf32>
    %110 = arith.mulf %98, %109 : vector<16x16xf32>
    %111 = vector.broadcast %104 : vector<1x16xf32> to vector<16x16xf32>
    %112 = arith.mulf %110, %111 : vector<16x16xf32>
    %113 = vector.broadcast %105 : vector<1x16xf32> to vector<16x16xf32>
    %114 = arith.addf %112, %113 : vector<16x16xf32>
    %cst_52 = arith.constant 0.000000e+00 : f32
    %115 = vector.broadcast %cst_52 : f32 to vector<16x16xf32>
    %116 = arith.maximumf %114, %115 : vector<16x16xf32>
    %c0_53 = arith.constant 0 : index
    %c0_54 = arith.constant 0 : index
    %117 = vector.load %arg5[%c0_53, %c0_54] : memref<16x128xf32, #tpu.memory_space<vmem>>, vector<16x128xf32>
    %cst_55 = arith.constant dense<0.000000e+00> : vector<16x128xf32>
    %118 = tpu.matmul %116, %117, %cst_55 {dimension_numbers = #tpu.dot_dimension_numbers<[1], [0], [0], [1], [0, 0, 1, 1], [], []>} : vector<16x16xf32>, vector<16x128xf32>, vector<16x128xf32> -> vector<16x128xf32>
    %cst_56 = arith.constant dense<0.000000e+00> : vector<128xf32>
    %119 = vector.multi_reduction <add>, %118, %cst_56 [0] : vector<16x128xf32> to vector<128xf32>
    %120 = vector.shape_cast %119 : vector<128xf32> to vector<1x128xf32>
    %cst_57 = arith.constant 1.600000e+01 : f32
    %121 = vector.broadcast %cst_57 : f32 to vector<1x128xf32>
    %122 = arith.divf %120, %121 : vector<1x128xf32>
    %123 = vector.broadcast %122 : vector<1x128xf32> to vector<16x128xf32>
    %124 = arith.subf %118, %123 : vector<16x128xf32>
    %125 = arith.mulf %124, %124 : vector<16x128xf32>
    %cst_58 = arith.constant dense<0.000000e+00> : vector<128xf32>
    %126 = vector.multi_reduction <add>, %125, %cst_58 [0] : vector<16x128xf32> to vector<128xf32>
    %127 = vector.shape_cast %126 : vector<128xf32> to vector<1x128xf32>
    %cst_59 = arith.constant 1.600000e+01 : f32
    %128 = vector.broadcast %cst_59 : f32 to vector<1x128xf32>
    %129 = arith.divf %127, %128 : vector<1x128xf32>
    %c8 = arith.constant 8 : index
    %c0_60 = arith.constant 0 : index
    %130 = vector.load %arg8[%c8, %c0_60] : memref<10x128xf32, #tpu.memory_space<vmem>>, vector<1x128xf32>
    %c9 = arith.constant 9 : index
    %c0_61 = arith.constant 0 : index
    %131 = vector.load %arg8[%c9, %c0_61] : memref<10x128xf32, #tpu.memory_space<vmem>>, vector<1x128xf32>
    %cst_62 = arith.constant 9.99999974E-6 : f32
    %132 = vector.broadcast %cst_62 : f32 to vector<1x128xf32>
    %133 = arith.addf %129, %132 : vector<1x128xf32>
    %134 = math.rsqrt %133 : vector<1x128xf32>
    %135 = vector.broadcast %134 : vector<1x128xf32> to vector<16x128xf32>
    %136 = arith.mulf %124, %135 : vector<16x128xf32>
    %137 = vector.broadcast %130 : vector<1x128xf32> to vector<16x128xf32>
    %138 = arith.mulf %136, %137 : vector<16x128xf32>
    %139 = vector.broadcast %131 : vector<1x128xf32> to vector<16x128xf32>
    %140 = arith.addf %138, %139 : vector<16x128xf32>
    %141 = arith.negf %140 : vector<16x128xf32>
    %142 = math.exp %141 : vector<16x128xf32>
    %cst_63 = arith.constant 1.000000e+00 : f32
    %143 = vector.broadcast %cst_63 : f32 to vector<16x128xf32>
    %144 = arith.addf %143, %142 : vector<16x128xf32>
    %145 = arith.divf %143, %144 : vector<16x128xf32>
    %c0_64 = arith.constant 0 : index
    %c0_65 = arith.constant 0 : index
    %146 = vector.load %arg9[%c0_64, %c0_65] : memref<16x128xf32, #tpu.memory_space<vmem>>, vector<16x128xf32>
    tpu.vector_store %arg9[%c0_64, %c0_65], %145 {strides = array<i32>} : memref<16x128xf32, #tpu.memory_space<vmem>>, vector<16x128xf32>,
    return
  }
}

</mosaic_0001>

<llo_original>
// kernel: tile.33
$region0: #{tile.33}
  #allocation0 [shape = 's32[1]{0}', space=sflag, size = 0x4, scoped, tag = 'scoped memory for tile.33']
  %s0 = inlined_call_operand.vmem [shape: f32[4], index: 0, kind: input, shape index: {}]
  %s1 = inlined_call_operand.vmem [shape: f32[8,4], index: 1, kind: output, shape index: {}]
  // Predicated region
  $region2: #{tile.33} parent=0 // pred_check
    _
  $region3: #{tile.33} parent=0 // pred_check_branch
    %3 = sbr.rel (0) target = $region5
  $region4: #{tile.33} parent=0 // pred_region
    _
  $region5: #{tile.33} parent=0 // pred_fallthru
    _
  %v4 = vld [vmem:[%s0] ss:$0 sm:$0xff]
  %5 = vst [vmem:[%s1] sm:$0xff] %v4

// kernel: tile.34
$region0: #{tile.34}
  %s0 = inlined_call_operand.vmem [shape: f32[8,4], index: 0, kind: input, shape index: {}]
  %s1 = inlined_call_operand.vmem [shape: f32[32], index: 1, kind: output, shape index: {}]
  $region1: #{tile.34} parent=0
    #allocation0 [shape = 'u8[4096]{0}', space=vmem, size = 0x1000, scoped, tag = 'scoped mem for output reshape']
    %v2 = vld [vmem:[%s0] sm:$0x1]
    %vm3 = vcmask 31744
    %4 = vst.msk [vmem:[#allocation0] sm:$0x1] %vm3, %v2
    %s5 = scalar_lea.vmem %s0, 7
    %v6 = vld [vmem:[%s5] sm:$0x1]
    %7 = vrot.lane.b32.xlu0 %v6, 28
    %v8 = vpop.permute.xlu0 %7
    %vm9 = vcmask 261344
    %10 = vst.msk [vmem:[#allocation0] sm:$0x1] %vm9, %v8
    %s11 = scalar_lea.vmem %s0, 6
    %v12 = vld [vmem:[%s11] sm:$0x1]
    %13 = vrot.lane.b32.xlu0 %v12, 24
    %v14 = vpop.permute.xlu0 %13
    %vm15 = vcmask 228544
    %16 = vst.msk [vmem:[#allocation0] sm:$0x1] %vm15, %v14
    %s17 = scalar_lea.vmem %s0, 5
    %v18 = vld [vmem:[%s17] sm:$0x1]
    %19 = vrot.lane.b32.xlu0 %v18, 20
    %v20 = vpop.permute.xlu0 %19
    %vm21 = vcmask 195744
    %22 = vst.msk [vmem:[#allocation0] sm:$0x1] %vm21, %v20
    %s23 = scalar_lea.vmem %s0, 4
    %v24 = vld [vmem:[%s23] sm:$0x1]
    %25 = vrot.lane.b32.xlu0 %v24, 16
    %v26 = vpop.permute.xlu0 %25
    %vm27 = vcmask 162944
    %28 = vst.msk [vmem:[#allocation0] sm:$0x1] %vm27, %v26
    %s29 = scalar_lea.vmem %s0, 3
    %v30 = vld [vmem:[%s29] sm:$0x1]
    %31 = vrot.lane.b32.xlu0 %v30, 12
    %v32 = vpop.permute.xlu0 %31
    %vm33 = vcmask 130144
    %34 = vst.msk [vmem:[#allocation0] sm:$0x1] %vm33, %v32
    %s35 = scalar_lea.vmem %s0, 2
    %v36 = vld [vmem:[%s35] sm:$0x1]
    %37 = vrot.lane.b32.xlu0 %v36, 8
    %v38 = vpop.permute.xlu0 %37
    %vm39 = vcmask 97344
    %40 = vst.msk [vmem:[#allocation0] sm:$0x1] %vm39, %v38
    %s41 = scalar_lea.vmem %s0, 1
    %v42 = vld [vmem:[%s41] sm:$0x1]
    %43 = vrot.lane.b32.xlu0 %v42, 4
    %v44 = vpop.permute.xlu0 %43
    %vm45 = vcmask 64544
    %46 = vst.msk [vmem:[#allocation0] sm:$0x1] %vm45, %v44
    %s48 = sshll.u32 1, 1
    %s49 = ssub.s32 %s48, 1
    %v51 = vld [vmem:[#allocation0] sm:%s49]
    %s52 = sshll.u32 1, 1
    %s53 = ssub.s32 %s52, 1
    %54 = vst [vmem:[%s1] sm:%s53] %v51

// kernel: tile.23
$region0: #{tile.23}
  #allocation0 [shape = 's32[1]{0}', space=sflag, size = 0x4, scoped, tag = 'scoped memory for tile.23']
  %s0 = inlined_call_operand.vmem [shape: f32[16], index: 0, kind: input, shape index: {}]
  %s1 = inlined_call_operand.vmem [shape: f32[8,16], index: 1, kind: output, shape index: {}]
  // Predicated region
  $region2: #{tile.23} parent=0 // pred_check
    _
  $region3: #{tile.23} parent=0 // pred_check_branch
    %3 = sbr.rel (0) target = $region5
  $region4: #{tile.23} parent=0 // pred_region
    _
  $region5: #{tile.23} parent=0 // pred_fallthru
    _
  %v4 = vld [vmem:[%s0] ss:$0 sm:$0xff]
  %5 = vst [vmem:[%s1] sm:$0xff] %v4

// kernel: solution_model_forward.1
$region0: #{solution_model_forward.1}
  #allocation0 [shape = 'u32[]', space=smem, size = 0x4, offset = 0x4, fixed_abs, tag = 'smem constant byte address 0x4 - core index']
  #allocation1 [shape = 'u32[144,128]{1,0:T(1,128)}', space=vmem, size = 0x12000, scoped, tag = 'internal scratch']
  %s0 = inlined_call_operand.vmem [shape: f32[16,64], index: 0, kind: input, shape index: {}]
  %s1 = inlined_call_operand.vmem [shape: f32[64,128], index: 1, kind: input, shape index: {}]
  %s2 = inlined_call_operand.vmem [shape: f32[128,32], index: 2, kind: input, shape index: {}]
  %s3 = inlined_call_operand.vmem [shape: f32[32,32], index: 3, kind: input, shape index: {}]
  %s4 = inlined_call_operand.vmem [shape: f32[32,16], index: 4, kind: input, shape index: {}]
  %s5 = inlined_call_operand.vmem [shape: f32[16,128], index: 5, kind: input, shape index: {}]
  %s6 = inlined_call_operand.vmem [shape: f32[128,128], index: 6, kind: input, shape index: {}]
  %s7 = inlined_call_operand.vmem [shape: f32[32,32], index: 7, kind: input, shape index: {}]
  %s8 = inlined_call_operand.vmem [shape: f32[10,128], index: 8, kind: input, shape index: {}]
  %s9 = inlined_call_operand.vmem [shape: f32[16,128], index: 9, kind: output, shape index: {}]
  %s10 = sld [smem:[#allocation0]]
  $region46: #{solution_model_forward.1} parent=0
    _
  %s12 = ssub.s32 1, %s10
  %s13 = scalar_select 0, %s12, %s10
  // Predicated region
  $region2: #{solution_model_forward.1} parent=0 // pred_check
    _
  $region3: #{solution_model_forward.1} parent=0 // pred_check_branch
    %15 = sbr.rel (0) target = $region5
  $region4: #{solution_model_forward.1} parent=0 // pred_region
    _
  $region5: #{solution_model_forward.1} parent=0 // pred_fallthru
    _
  // Predicated region
  $region6: #{solution_model_forward.1} parent=0 // pred_check
    _
  $region7: #{solution_model_forward.1} parent=0 // pred_check_branch
    %17 = sbr.rel (0) target = $region9
  $region8: #{solution_model_forward.1} parent=0 // pred_region
    _
  $region9: #{solution_model_forward.1} parent=0 // pred_fallthru
    _
  // Predicated region
  $region10: #{solution_model_forward.1} parent=0 // pred_check
    _
  $region11: #{solution_model_forward.1} parent=0 // pred_check_branch
    %19 = sbr.rel (0) target = $region13
  $region12: #{solution_model_forward.1} parent=0 // pred_region
    _
  $region13: #{solution_model_forward.1} parent=0 // pred_fallthru
    _
  // Predicated region
  $region14: #{solution_model_forward.1} parent=0 // pred_check
    _
  $region15: #{solution_model_forward.1} parent=0 // pred_check_branch
    %21 = sbr.rel (0) target = $region17
  $region16: #{solution_model_forward.1} parent=0 // pred_region
    _
  $region17: #{solution_model_forward.1} parent=0 // pred_fallthru
    _
  // Predicated region
  $region18: #{solution_model_forward.1} parent=0 // pred_check
    _
  $region19: #{solution_model_forward.1} parent=0 // pred_check_branch
    %23 = sbr.rel (0) target = $region21
  $region20: #{solution_model_forward.1} parent=0 // pred_region
    _
  $region21: #{solution_model_forward.1} parent=0 // pred_fallthru
    _
  // Predicated region
  $region22: #{solution_model_forward.1} parent=0 // pred_check
    _
  $region23: #{solution_model_forward.1} parent=0 // pred_check_branch
    %25 = sbr.rel (0) target = $region25
  $region24: #{solution_model_forward.1} parent=0 // pred_region
    _
  $region25: #{solution_model_forward.1} parent=0 // pred_fallthru
    _
  // Predicated region
  $region26: #{solution_model_forward.1} parent=0 // pred_check
    _
  $region27: #{solution_model_forward.1} parent=0 // pred_check_branch
    %27 = sbr.rel (0) target = $region29
  $region28: #{solution_model_forward.1} parent=0 // pred_region
    _
  $region29: #{solution_model_forward.1} parent=0 // pred_fallthru
    _
  // Predicated region
  $region30: #{solution_model_forward.1} parent=0 // pred_check
    _
  $region31: #{solution_model_forward.1} parent=0 // pred_check_branch
    %29 = sbr.rel (0) target = $region33
  $region32: #{solution_model_forward.1} parent=0 // pred_region
    _
  $region33: #{solution_model_forward.1} parent=0 // pred_fallthru
    _
  // Predicated region
  $region34: #{solution_model_forward.1} parent=0 // pred_check
    _
  $region35: #{solution_model_forward.1} parent=0 // pred_check_branch
    %31 = sbr.rel (0) target = $region37
  $region36: #{solution_model_forward.1} parent=0 // pred_region
    _
  $region37: #{solution_model_forward.1} parent=0 // pred_fallthru
    _
  %v32 = vld [vmem:[%s0] sm:$0xff]
  %v33 = vld [vmem:[%s0 + $0x8] sm:$0xff]
  %v34 = vld [vmem:[%s1] sm:$0xff]
  %v35 = vld [vmem:[%s1 + $0x8] sm:$0xff]
  %v36 = vld [vmem:[%s1 + $0x10] sm:$0xff]
  %v37 = vld [vmem:[%s1 + $0x18] sm:$0xff]
  %v38 = vld [vmem:[%s1 + $0x20] sm:$0xff]
  %v39 = vld [vmem:[%s1 + $0x28] sm:$0xff]
  %v40 = vld [vmem:[%s1 + $0x30] sm:$0xff]
  %v41 = vld [vmem:[%s1 + $0x38] sm:$0xff]
  %v42 = vld [vmem:[%s6] sm:$0xff]
  %v43 = vld [vmem:[%s6 + $0x8] sm:$0xff]
  %v44 = vld [vmem:[%s6 + $0x10] sm:$0xff]
  %v45 = vld [vmem:[%s6 + $0x18] sm:$0xff]
  %v46 = vld [vmem:[%s6 + $0x20] sm:$0xff]
  %v47 = vld [vmem:[%s6 + $0x28] sm:$0xff]
  %v48 = vld [vmem:[%s6 + $0x30] sm:$0xff]
  %v49 = vld [vmem:[%s6 + $0x38] sm:$0xff]
  %v50 = vld [vmem:[%s6 + $0x40] sm:$0xff]
  %v51 = vld [vmem:[%s6 + $0x48] sm:$0xff]
  %v52 = vld [vmem:[%s6 + $0x50] sm:$0xff]
  %v53 = vld [vmem:[%s6 + $0x58] sm:$0xff]
  %v54 = vld [vmem:[%s6 + $0x60] sm:$0xff]
  %v55 = vld [vmem:[%s6 + $0x68] sm:$0xff]
  %v56 = vld [vmem:[%s6 + $0x70] sm:$0xff]
  %v57 = vld [vmem:[%s6 + $0x78] sm:$0xff]
  %vm58 = vcmask 523264
  %v60 = vsel %vm58, %v32, 0
  %v63 = vsel %vm58, %v33, 0
  %65 = vmatprep.subr.mxu0 0.0
  %66 = vmatpush1.msra.mxu0 0.0
  %67 = vmatprep.subr.mxu0 0.0
  %68 = vmatpush1.msra.mxu0 0.0
  %69 = vmatprep.subr.mxu0 0.0
  %70 = vmatpush1.msra.mxu0 0.0
  %71 = vmatprep.subr.mxu0 0.0
  %72 = vmatpush1.msra.mxu0 0.0
  %73 = vmatprep.subr.mxu0 0.0
  %74 = vmatpush1.msra.mxu0 0.0
  %75 = vmatprep.subr.mxu0 0.0
  %76 = vmatpush1.msra.mxu0 0.0
  %77 = vmatprep.subr.mxu0 0.0
  %78 = vmatpush1.msra.mxu0 0.0
  %79 = vmatprep.subr.mxu0 0.0
  %80 = vmatpush1.msra.mxu0 0.0
  %81 = vmatprep.subr.mxu0 0.0
  %82 = vmatpush1.msra.mxu0 %v41
  %83 = vmatprep.subr.mxu0 0.0
  %84 = vmatpush1.msra.mxu0 %v40
  %85 = vmatprep.subr.mxu0 0.0
  %86 = vmatpush1.msra.mxu0 %v39
  %87 = vmatprep.subr.mxu0 0.0
  %88 = vmatpush1.msra.mxu0 %v38
  %89 = vmatprep.subr.mxu0 0.0
  %90 = vmatpush1.msra.mxu0 %v37
  %91 = vmatprep.subr.mxu0 0.0
  %92 = vmatpush1.msra.mxu0 %v36
  %93 = vmatprep.subr.mxu0 0.0
  %94 = vmatpush1.msra.mxu0 %v35
  %95 = vmatprep.subr.mxu0 0.0
  %96 = vmatpush1.msra.mxu0 %v34
  %97 = vmatprep.subr.mxu0 0.0
  %98 = vmatpush2.msra.mxu0 0.0
  %99 = vmatprep.subr.mxu0 0.0
  %100 = vmatpush2.msra.mxu0 0.0
  %101 = vmatprep.subr.mxu0 0.0
  %102 = vmatpush2.msra.mxu0 0.0
  %103 = vmatprep.subr.mxu0 0.0
  %104 = vmatpush2.msra.mxu0 0.0
  %105 = vmatprep.subr.mxu0 0.0
  %106 = vmatpush2.msra.mxu0 0.0
  %107 = vmatprep.subr.mxu0 0.0
  %108 = vmatpush2.msra.mxu0 0.0
  %109 = vmatprep.subr.mxu0 0.0
  %110 = vmatpush2.msra.mxu0 0.0
  %111 = vmatprep.subr.mxu0 0.0
  %112 = vmatpush2.msra.mxu0 0.0
  %113 = vmatprep.subr.mxu0 0.0
  %114 = vmatpush2.msra.mxu0 0.0
  %115 = vmatprep.subr.mxu0 0.0
  %116 = vmatpush2.msra.mxu0 0.0
  %117 = vmatprep.subr.mxu0 0.0
  %118 = vmatpush2.msra.mxu0 0.0
  %119 = vmatprep.subr.mxu0 0.0
  %120 = vmatpush2.msra.mxu0 0.0
  %121 = vmatprep.subr.mxu0 0.0
  %122 = vmatpush2.msra.mxu0 0.0
  %123 = vmatprep.subr.mxu0 0.0
  %124 = vmatpush2.msra.mxu0 0.0
  %125 = vmatprep.subr.mxu0 0.0
  %126 = vmatpush2.msra.mxu0 0.0
  %127 = vmatprep.subr.mxu0 0.0
  %128 = vmatpush2.msra.mxu0 0.0
  %129 = vmatprep.mubr.f32.mxu0 0.0
  %130 = vmatmul.mubr.f32.gmra.mxu0 %v60
  %v131 = vpop.f32.mrf.mxu0
  %v132 = vadd.f32 0.0, %v131
  %v133 = vpop.f32.mrf.mxu0
  %134 = vmatprep.mubr.f32.mxu0 0.0
  %135 = vmatmul.mubr.f32.gmra.mxu0 %v63
  %v136 = vpop.f32.mrf.mxu0
  %v137 = vadd.f32 0.0, %v136
  %v138 = vpop.f32.mrf.mxu0
  %139 = vdwg.mxu0
  %v140 = vadd.f32 %v132, %v137
  %v141 = vrot.slane %v140, 4
  %v142 = vadd.f32 %v140, %v141
  %v143 = vrot.slane %v142, 2
  %v144 = vadd.f32 %v142, %v143
  %v145 = vrot.slane %v144, 1
  %v146 = vadd.f32 %v144, %v145
  %v147 = vrcp.pop 16.0
  %v148 = vmul.f32 %v146, %v147
  %149 = vmatprep.subr.mxu0 0.0
  %150 = vmatpush1.msra.mxu0 %v57
  %151 = vmatprep.subr.mxu0 0.0
  %152 = vmatpush1.msra.mxu0 %v56
  %153 = vmatprep.subr.mxu0 0.0
  %154 = vmatpush1.msra.mxu0 %v55
  %155 = vmatprep.subr.mxu0 0.0
  %156 = vmatpush1.msra.mxu0 %v54
  %157 = vmatprep.subr.mxu0 0.0
  %158 = vmatpush1.msra.mxu0 %v53
  %159 = vmatprep.subr.mxu0 0.0
  %160 = vmatpush1.msra.mxu0 %v52
  %161 = vmatprep.subr.mxu0 0.0
  %162 = vmatpush1.msra.mxu0 %v51
  %163 = vmatprep.subr.mxu0 0.0
  %164 = vmatpush1.msra.mxu0 %v50
  %165 = vmatprep.subr.mxu0 0.0
  %166 = vmatpush1.msra.mxu0 %v49
  %167 = vmatprep.subr.mxu0 0.0
  %168 = vmatpush1.msra.mxu0 %v48
  %169 = vmatprep.subr.mxu0 0.0
  %170 = vmatpush1.msra.mxu0 %v47
  %171 = vmatprep.subr.mxu0 0.0
  %172 = vmatpush1.msra.mxu0 %v46
  %173 = vmatprep.subr.mxu0 0.0
  %174 = vmatpush1.msra.mxu0 %v45
  %175 = vmatprep.subr.mxu0 0.0
  %176 = vmatpush1.msra.mxu0 %v44
  %177 = vmatprep.subr.mxu0 0.0
  %178 = vmatpush1.msra.mxu0 %v43
  %179 = vmatprep.subr.mxu0 0.0
  %180 = vmatpush1.msra.mxu0 %v42
  %181 = vmatprep.subr.mxu0 0.0
  %182 = vmatpush2.msra.mxu0 0.0
  %183 = vmatprep.subr.mxu0 0.0
  %184 = vmatpush2.msra.mxu0 0.0
  %185 = vmatprep.subr.mxu0 0.0
  %186 = vmatpush2.msra.mxu0 0.0
  %187 = vmatprep.subr.mxu0 0.0
  %188 = vmatpush2.msra.mxu0 0.0
  %189 = vmatprep.subr.mxu0 0.0
  %190 = vmatpush2.msra.mxu0 0.0
  %191 = vmatprep.subr.mxu0 0.0
  %192 = vmatpush2.msra.mxu0 0.0
  %193 = vmatprep.subr.mxu0 0.0
  %194 = vmatpush2.msra.mxu0 0.0
  %195 = vmatprep.subr.mxu0 0.0
  %196 = vmatpush2.msra.mxu0 0.0
  %197 = vmatprep.subr.mxu0 0.0
  %198 = vmatpush2.msra.mxu0 0.0
  %199 = vmatprep.subr.mxu0 0.0
  %200 = vmatpush2.msra.mxu0 0.0
  %201 = vmatprep.subr.mxu0 0.0
  %202 = vmatpush2.msra.mxu0 0.0
  %203 = vmatprep.subr.mxu0 0.0
  %204 = vmatpush2.msra.mxu0 0.0
  %205 = vmatprep.subr.mxu0 0.0
  %206 = vmatpush2.msra.mxu0 0.0
  %207 = vmatprep.subr.mxu0 0.0
  %208 = vmatpush2.msra.mxu0 0.0
  %209 = vmatprep.subr.mxu0 0.0
  %210 = vmatpush2.msra.mxu0 0.0
  %211 = vmatprep.subr.mxu0 0.0
  %212 = vmatpush2.msra.mxu0 0.0
  %213 = vmatprep.mubr.f32.mxu0 0.0
  %214 = vmatmul.mubr.f32.gmra.mxu0 %v148
  %v215 = vpop.f32.mrf.mxu0
  %v216 = vadd.f32 0.0, %v215
  %v217 = vpop.f32.mrf.mxu0
  %218 = vdwg.mxu0
  %v219 = vlaneseq
  %v220 = vshrl.u32 %v219, 7
  %v221 = vsub.s32 0, %v220
  %v222 = vrot.slane %v216, %v221
  %v223 = vsub.f32 %v132, %v222
  %v224 = vsub.f32 %v137, %v222
  %v225 = vmul.f32 %v223, %v223
  %v226 = vmul.f32 %v224, %v224
  %v227 = vadd.f32 %v225, %v226
  %v228 = vrot.slane %v227, 4
  %v229 = vadd.f32 %v227, %v228
  %v230 = vrot.slane %v229, 2
  %v231 = vadd.f32 %v229, %v230
  %v232 = vrot.slane %v231, 1
  %v233 = vadd.f32 %v231, %v232
  %v234 = vmul.f32 %v233, %v147
  %v235 = vld [vmem:[%s8] sm:$0x1]
  %v236 = vld [vmem:[%s8 + $0x1] sm:$0x1]
  %237 = vmatprep.subr.mxu0 0.0
  %238 = vmatpush1.msra.mxu0 %v57
  %239 = vmatprep.subr.mxu0 0.0
  %240 = vmatpush1.msra.mxu0 %v56
  %241 = vmatprep.subr.mxu0 0.0
  %242 = vmatpush1.msra.mxu0 %v55
  %243 = vmatprep.subr.mxu0 0.0
  %244 = vmatpush1.msra.mxu0 %v54
  %245 = vmatprep.subr.mxu0 0.0
  %246 = vmatpush1.msra.mxu0 %v53
  %247 = vmatprep.subr.mxu0 0.0
  %248 = vmatpush1.msra.mxu0 %v52
  %249 = vmatprep.subr.mxu0 0.0
  %250 = vmatpush1.msra.mxu0 %v51
  %251 = vmatprep.subr.mxu0 0.0
  %252 = vmatpush1.msra.mxu0 %v50
  %253 = vmatprep.subr.mxu0 0.0
  %254 = vmatpush1.msra.mxu0 %v49
  %255 = vmatprep.subr.mxu0 0.0
  %256 = vmatpush1.msra.mxu0 %v48
  %257 = vmatprep.subr.mxu0 0.0
  %258 = vmatpush1.msra.mxu0 %v47
  %259 = vmatprep.subr.mxu0 0.0
  %260 = vmatpush1.msra.mxu0 %v46
  %261 = vmatprep.subr.mxu0 0.0
  %262 = vmatpush1.msra.mxu0 %v45
  %263 = vmatprep.subr.mxu0 0.0
  %264 = vmatpush1.msra.mxu0 %v44
  %265 = vmatprep.subr.mxu0 0.0
  %266 = vmatpush1.msra.mxu0 %v43
  %267 = vmatprep.subr.mxu0 0.0
  %268 = vmatpush1.msra.mxu0 %v42
  %269 = vmatprep.subr.mxu0 0.0
  %270 = vmatpush2.msra.mxu0 0.0
  %271 = vmatprep.subr.mxu0 0.0
  %272 = vmatpush2.msra.mxu0 0.0
  %273 = vmatprep.subr.mxu0 0.0
  %274 = vmatpush2.msra.mxu0 0.0
  %275 = vmatprep.subr.mxu0 0.0
  %276 = vmatpush2.msra.mxu0 0.0
  %277 = vmatprep.subr.mxu0 0.0
  %278 = vmatpush2.msra.mxu0 0.0
  %279 = vmatprep.subr.mxu0 0.0
  %280 = vmatpush2.msra.mxu0 0.0
  %281 = vmatprep.subr.mxu0 0.0
  %282 = vmatpush2.msra.mxu0 0.0
  %283 = vmatprep.subr.mxu0 0.0
  %284 = vmatpush2.msra.mxu0 0.0
  %285 = vmatprep.subr.mxu0 0.0
  %286 = vmatpush2.msra.mxu0 0.0
  %287 = vmatprep.subr.mxu0 0.0
  %288 = vmatpush2.msra.mxu0 0.0
  %289 = vmatprep.subr.mxu0 0.0
  %290 = vmatpush2.msra.mxu0 0.0
  %291 = vmatprep.subr.mxu0 0.0
  %292 = vmatpush2.msra.mxu0 0.0
  %293 = vmatprep.subr.mxu0 0.0
  %294 = vmatpush2.msra.mxu0 0.0
  %295 = vmatprep.subr.mxu0 0.0
  %296 = vmatpush2.msra.mxu0 0.0
  %297 = vmatprep.subr.mxu0 0.0
  %298 = vmatpush2.msra.mxu0 0.0
  %299 = vmatprep.subr.mxu0 0.0
  %300 = vmatpush2.msra.mxu0 0.0
  %301 = vmatprep.mubr.f32.mxu0 0.0
  %302 = vmatmul.mubr.f32.gmra.mxu0 %v234
  %v303 = vpop.f32.mrf.mxu0
  %v304 = vadd.f32 1e-05, %v303
  %v305 = vpop.f32.mrf.mxu0
  %306 = vdwg.mxu0
  %v307 = vrsqrt.pop %v304
  %v308 = vlaneseq
  %v309 = vshrl.u32 %v308, 7
  %v310 = vsub.s32 0, %v309
  %v311 = vrot.slane %v307, %v310
  %v312 = vmul.f32 %v223, %v311
  %v313 = vmul.f32 %v224, %v311
  %v314 = vlaneseq
  %v315 = vshrl.u32 %v314, 7
  %v316 = vsub.s32 0, %v315
  %v317 = vrot.slane %v235, %v316
  %v318 = vmul.f32 %v312, %v317
  %v319 = vmul.f32 %v313, %v317
  %v320 = vlaneseq
  %v321 = vshrl.u32 %v320, 7
  %v322 = vsub.s32 0, %v321
  %v323 = vrot.slane %v236, %v322
  %v324 = vadd.f32 %v318, %v323
  %v325 = vadd.f32 %v319, %v323
  %v326 = vmax.f32 %v324, 0.0
  %v327 = vmax.f32 %v325, 0.0
  %v328 = vld [vmem:[%s2] sm:$0xff]
  %v329 = vld [vmem:[%s2 + $0x8] sm:$0xff]
  %v330 = vld [vmem:[%s2 + $0x10] sm:$0xff]
  %v331 = vld [vmem:[%s2 + $0x18] sm:$0xff]
  %v332 = vld [vmem:[%s2 + $0x20] sm:$0xff]
  %v333 = vld [vmem:[%s2 + $0x28] sm:$0xff]
  %v334 = vld [vmem:[%s2 + $0x30] sm:$0xff]
  %v335 = vld [vmem:[%s2 + $0x38] sm:$0xff]
  %v336 = vld [vmem:[%s2 + $0x40] sm:$0xff]
  %v337 = vld [vmem:[%s2 + $0x48] sm:$0xff]
  %v338 = vld [vmem:[%s2 + $0x50] sm:$0xff]
  %v339 = vld [vmem:[%s2 + $0x58] sm:$0xff]
  %v340 = vld [vmem:[%s2 + $0x60] sm:$0xff]
  %v341 = vld [vmem:[%s2 + $0x68] sm:$0xff]
  %v342 = vld [vmem:[%s2 + $0x70] sm:$0xff]
  %v343 = vld [vmem:[%s2 + $0x78] sm:$0xff]
  %v344 = vld [vmem:[%s7] sm:$0xff]
  %v345 = vld [vmem:[%s7 + $0x8] sm:$0xff]
  %v346 = vld [vmem:[%s7 + $0x10] sm:$0xff]
  %v347 = vld [vmem:[%s7 + $0x18] sm:$0xff]
  %348 = vmatprep.subr.mxu0 0.0
  %349 = vmatpush1.msra.mxu0 %v343
  %350 = vmatprep.subr.mxu0 0.0
  %351 = vmatpush1.msra.mxu0 %v342
  %352 = vmatprep.subr.mxu0 0.0
  %353 = vmatpush1.msra.mxu0 %v341
  %354 = vmatprep.subr.mxu0 0.0
  %355 = vmatpush1.msra.mxu0 %v340
  %356 = vmatprep.subr.mxu0 0.0
  %357 = vmatpush1.msra.mxu0 %v339
  %358 = vmatprep.subr.mxu0 0.0
  %359 = vmatpush1.msra.mxu0 %v338
  %360 = vmatprep.subr.mxu0 0.0
  %361 = vmatpush1.msra.mxu0 %v337
  %362 = vmatprep.subr.mxu0 0.0
  %363 = vmatpush1.msra.mxu0 %v336
  %364 = vmatprep.subr.mxu0 0.0
  %365 = vmatpush1.msra.mxu0 %v335
  %366 = vmatprep.subr.mxu0 0.0
  %367 = vmatpush1.msra.mxu0 %v334
  %368 = vmatprep.subr.mxu0 0.0
  %369 = vmatpush1.msra.mxu0 %v333
  %370 = vmatprep.subr.mxu0 0.0
  %371 = vmatpush1.msra.mxu0 %v332
  %372 = vmatprep.subr.mxu0 0.0
  %373 = vmatpush1.msra.mxu0 %v331
  %374 = vmatprep.subr.mxu0 0.0
  %375 = vmatpush1.msra.mxu0 %v330
  %376 = vmatprep.subr.mxu0 0.0
  %377 = vmatpush1.msra.mxu0 %v329
  %378 = vmatprep.subr.mxu0 0.0
  %379 = vmatpush1.msra.mxu0 %v328
  %380 = vmatprep.subr.mxu0 0.0
  %381 = vmatpush2.msra.mxu0 0.0
  %382 = vmatprep.subr.mxu0 0.0
  %383 = vmatpush2.msra.mxu0 0.0
  %384 = vmatprep.subr.mxu0 0.0
  %385 = vmatpush2.msra.mxu0 0.0
  %386 = vmatprep.subr.mxu0 0.0
  %387 = vmatpush2.msra.mxu0 0.0
  %388 = vmatprep.subr.mxu0 0.0
  %389 = vmatpush2.msra.mxu0 0.0
  %390 = vmatprep.subr.mxu0 0.0
  %391 = vmatpush2.msra.mxu0 0.0
  %392 = vmatprep.subr.mxu0 0.0
  %393 = vmatpush2.msra.mxu0 0.0
  %394 = vmatprep.subr.mxu0 0.0
  %395 = vmatpush2.msra.mxu0 0.0
  %396 = vmatprep.subr.mxu0 0.0
  %397 = vmatpush2.msra.mxu0 0.0
  %398 = vmatprep.subr.mxu0 0.0
  %399 = vmatpush2.msra.mxu0 0.0
  %400 = vmatprep.subr.mxu0 0.0
  %401 = vmatpush2.msra.mxu0 0.0
  %402 = vmatprep.subr.mxu0 0.0
  %403 = vmatpush2.msra.mxu0 0.0
  %404 = vmatprep.subr.mxu0 0.0
  %405 = vmatpush2.msra.mxu0 0.0
  %406 = vmatprep.subr.mxu0 0.0
  %407 = vmatpush2.msra.mxu0 0.0
  %408 = vmatprep.subr.mxu0 0.0
  %409 = vmatpush2.msra.mxu0 0.0
  %410 = vmatprep.subr.mxu0 0.0
  %411 = vmatpush2.msra.mxu0 0.0
  %412 = vmatprep.mubr.f32.mxu0 0.0
  %413 = vmatmul.mubr.f32.gmra.mxu0 %v326
  %v414 = vpop.f32.mrf.mxu0
  %v415 = vadd.f32 0.0, %v414
  %v416 = vpop.f32.mrf.mxu0
  %417 = vmatprep.mubr.f32.mxu0 0.0
  %418 = vmatmul.mubr.f32.gmra.mxu0 %v327
  %v419 = vpop.f32.mrf.mxu0
  %v420 = vadd.f32 0.0, %v419
  %v421 = vpop.f32.mrf.mxu0
  %422 = vdwg.mxu0
  %vm423 = vcmask 261120
  %v424 = vsel %vm423, %v415, 0.0
  %v425 = vsel %vm423, %v420, 0.0
  %v426 = vadd.f32 %v424, %v425
  %v427 = vrot.slane %v426, 4
  %v428 = vadd.f32 %v426, %v427
  %v429 = vrot.slane %v428, 2
  %v430 = vadd.f32 %v428, %v429
  %v431 = vrot.slane %v430, 1
  %v432 = vadd.f32 %v430, %v431
  %v433 = vmul.f32 %v432, %v147
  %v435 = vsel %vm423, %v433, 0
  %437 = vmatprep.subr.mxu0 0.0
  %438 = vmatpush1.msra.mxu0 0.0
  %439 = vmatprep.subr.mxu0 0.0
  %440 = vmatpush1.msra.mxu0 0.0
  %441 = vmatprep.subr.mxu0 0.0
  %442 = vmatpush1.msra.mxu0 0.0
  %443 = vmatprep.subr.mxu0 0.0
  %444 = vmatpush1.msra.mxu0 0.0
  %445 = vmatprep.subr.mxu0 0.0
  %446 = vmatpush1.msra.mxu0 0.0
  %447 = vmatprep.subr.mxu0 0.0
  %448 = vmatpush1.msra.mxu0 0.0
  %449 = vmatprep.subr.mxu0 0.0
  %450 = vmatpush1.msra.mxu0 0.0
  %451 = vmatprep.subr.mxu0 0.0
  %452 = vmatpush1.msra.mxu0 0.0
  %453 = vmatprep.subr.mxu0 0.0
  %454 = vmatpush1.msra.mxu0 0.0
  %455 = vmatprep.subr.mxu0 0.0
  %456 = vmatpush1.msra.mxu0 0.0
  %457 = vmatprep.subr.mxu0 0.0
  %458 = vmatpush1.msra.mxu0 0.0
  %459 = vmatprep.subr.mxu0 0.0
  %460 = vmatpush1.msra.mxu0 0.0
  %461 = vmatprep.subr.mxu0 0.0
  %462 = vmatpush1.msra.mxu0 %v347
  %463 = vmatprep.subr.mxu0 0.0
  %464 = vmatpush1.msra.mxu0 %v346
  %465 = vmatprep.subr.mxu0 0.0
  %466 = vmatpush1.msra.mxu0 %v345
  %467 = vmatprep.subr.mxu0 0.0
  %468 = vmatpush1.msra.mxu0 %v344
  %469 = vmatprep.subr.mxu0 0.0
  %470 = vmatpush2.msra.mxu0 0.0
  %471 = vmatprep.subr.mxu0 0.0
  %472 = vmatpush2.msra.mxu0 0.0
  %473 = vmatprep.subr.mxu0 0.0
  %474 = vmatpush2.msra.mxu0 0.0
  %475 = vmatprep.subr.mxu0 0.0
  %476 = vmatpush2.msra.mxu0 0.0
  %477 = vmatprep.subr.mxu0 0.0
  %478 = vmatpush2.msra.mxu0 0.0
  %479 = vmatprep.subr.mxu0 0.0
  %480 = vmatpush2.msra.mxu0 0.0
  %481 = vmatprep.subr.mxu0 0.0
  %482 = vmatpush2.msra.mxu0 0.0
  %483 = vmatprep.subr.mxu0 0.0
  %484 = vmatpush2.msra.mxu0 0.0
  %485 = vmatprep.subr.mxu0 0.0
  %486 = vmatpush2.msra.mxu0 0.0
  %487 = vmatprep.subr.mxu0 0.0
  %488 = vmatpush2.msra.mxu0 0.0
  %489 = vmatprep.subr.mxu0 0.0
  %490 = vmatpush2.msra.mxu0 0.0
  %491 = vmatprep.subr.mxu0 0.0
  %492 = vmatpush2.msra.mxu0 0.0
  %493 = vmatprep.subr.mxu0 0.0
  %494 = vmatpush2.msra.mxu0 0.0
  %495 = vmatprep.subr.mxu0 0.0
  %496 = vmatpush2.msra.mxu0 0.0
  %497 = vmatprep.subr.mxu0 0.0
  %498 = vmatpush2.msra.mxu0 0.0
  %499 = vmatprep.subr.mxu0 0.0
  %500 = vmatpush2.msra.mxu0 0.0
  %501 = vmatprep.mubr.f32.mxu0 0.0
  %502 = vmatmul.mubr.f32.gmra.mxu0 %v435
  %v503 = vpop.f32.mrf.mxu0
  %v504 = vadd.f32 0.0, %v503
  %v505 = vpop.f32.mrf.mxu0
  %506 = vdwg.mxu0
  %v507 = vlaneseq
  %v508 = vshrl.u32 %v507, 7
  %v509 = vsub.s32 0, %v508
  %v510 = vrot.slane %v504, %v509
  %v511 = vsub.f32 %v415, %v510
  %v512 = vsub.f32 %v420, %v510
  %v513 = vmul.f32 %v511, %v511
  %v514 = vmul.f32 %v512, %v512
  %v515 = vsel %vm423, %v513, 0.0
  %v516 = vsel %vm423, %v514, 0.0
  %v517 = vadd.f32 %v515, %v516
  %v518 = vrot.slane %v517, 4
  %v519 = vadd.f32 %v517, %v518
  %v520 = vrot.slane %v519, 2
  %v521 = vadd.f32 %v519, %v520
  %v522 = vrot.slane %v521, 1
  %v523 = vadd.f32 %v521, %v522
  %v524 = vmul.f32 %v523, %v147
  %v525 = vld [vmem:[%s8 + $0x2] sm:$0x1]
  %v526 = vld [vmem:[%s8 + $0x3] sm:$0x1]
  %v528 = vsel %vm423, %v524, 0
  %530 = vmatprep.subr.mxu0 0.0
  %531 = vmatpush1.msra.mxu0 0.0
  %532 = vmatprep.subr.mxu0 0.0
  %533 = vmatpush1.msra.mxu0 0.0
  %534 = vmatprep.subr.mxu0 0.0
  %535 = vmatpush1.msra.mxu0 0.0
  %536 = vmatprep.subr.mxu0 0.0
  %537 = vmatpush1.msra.mxu0 0.0
  %538 = vmatprep.subr.mxu0 0.0
  %539 = vmatpush1.msra.mxu0 0.0
  %540 = vmatprep.subr.mxu0 0.0
  %541 = vmatpush1.msra.mxu0 0.0
  %542 = vmatprep.subr.mxu0 0.0
  %543 = vmatpush1.msra.mxu0 0.0
  %544 = vmatprep.subr.mxu0 0.0
  %545 = vmatpush1.msra.mxu0 0.0
  %546 = vmatprep.subr.mxu0 0.0
  %547 = vmatpush1.msra.mxu0 0.0
  %548 = vmatprep.subr.mxu0 0.0
  %549 = vmatpush1.msra.mxu0 0.0
  %550 = vmatprep.subr.mxu0 0.0
  %551 = vmatpush1.msra.mxu0 0.0
  %552 = vmatprep.subr.mxu0 0.0
  %553 = vmatpush1.msra.mxu0 0.0
  %554 = vmatprep.subr.mxu0 0.0
  %555 = vmatpush1.msra.mxu0 %v347
  %556 = vmatprep.subr.mxu0 0.0
  %557 = vmatpush1.msra.mxu0 %v346
  %558 = vmatprep.subr.mxu0 0.0
  %559 = vmatpush1.msra.mxu0 %v345
  %560 = vmatprep.subr.mxu0 0.0
  %561 = vmatpush1.msra.mxu0 %v344
  %562 = vmatprep.subr.mxu0 0.0
  %563 = vmatpush2.msra.mxu0 0.0
  %564 = vmatprep.subr.mxu0 0.0
  %565 = vmatpush2.msra.mxu0 0.0
  %566 = vmatprep.subr.mxu0 0.0
  %567 = vmatpush2.msra.mxu0 0.0
  %568 = vmatprep.subr.mxu0 0.0
  %569 = vmatpush2.msra.mxu0 0.0
  %570 = vmatprep.subr.mxu0 0.0
  %571 = vmatpush2.msra.mxu0 0.0
  %572 = vmatprep.subr.mxu0 0.0
  %573 = vmatpush2.msra.mxu0 0.0
  %574 = vmatprep.subr.mxu0 0.0
  %575 = vmatpush2.msra.mxu0 0.0
  %576 = vmatprep.subr.mxu0 0.0
  %577 = vmatpush2.msra.mxu0 0.0
  %578 = vmatprep.subr.mxu0 0.0
  %579 = vmatpush2.msra.mxu0 0.0
  %580 = vmatprep.subr.mxu0 0.0
  %581 = vmatpush2.msra.mxu0 0.0
  %582 = vmatprep.subr.mxu0 0.0
  %583 = vmatpush2.msra.mxu0 0.0
  %584 = vmatprep.subr.mxu0 0.0
  %585 = vmatpush2.msra.mxu0 0.0
  %586 = vmatprep.subr.mxu0 0.0
  %587 = vmatpush2.msra.mxu0 0.0
  %588 = vmatprep.subr.mxu0 0.0
  %589 = vmatpush2.msra.mxu0 0.0
  %590 = vmatprep.subr.mxu0 0.0
  %591 = vmatpush2.msra.mxu0 0.0
  %592 = vmatprep.subr.mxu0 0.0
  %593 = vmatpush2.msra.mxu0 0.0
  %594 = vmatprep.mubr.f32.mxu0 0.0
  %595 = vmatmul.mubr.f32.gmra.mxu0 %v528
  %v596 = vpop.f32.mrf.mxu0
  %v597 = vadd.f32 1e-05, %v596
  %v598 = vpop.f32.mrf.mxu0
  %599 = vdwg.mxu0
  %v600 = vrsqrt.pop %v597
  %v601 = vlaneseq
  %v602 = vshrl.u32 %v601, 7
  %v603 = vsub.s32 0, %v602
  %v604 = vrot.slane %v600, %v603
  %v605 = vmul.f32 %v511, %v604
  %v606 = vmul.f32 %v512, %v604
  %v607 = vlaneseq
  %v608 = vshrl.u32 %v607, 7
  %v609 = vsub.s32 0, %v608
  %v610 = vrot.slane %v525, %v609
  %v611 = vmul.f32 %v605, %v610
  %v612 = vmul.f32 %v606, %v610
  %v613 = vlaneseq
  %v614 = vshrl.u32 %v613, 7
  %v615 = vsub.s32 0, %v614
  %v616 = vrot.slane %v526, %v615
  %v617 = vadd.f32 %v611, %v616
  %v618 = vadd.f32 %v612, %v616
  %v619 = vxor.u32 %v617, 2147483648
  %v620 = vxor.u32 %v618, 2147483648
  %v621 = vmul.f32 %v619, 1.442695
  %v622 = vpow.pop %v621
  %v623 = vmul.f32 %v620, 1.442695
  %v624 = vpow.pop %v623
  %v625 = vadd.f32 %v622, 1.0
  %v626 = vadd.f32 %v624, 1.0
  %v627 = vrcp.pop %v625
  %v628 = vmul.f32 1.0, %v627
  %v629 = vrcp.pop %v626
  %v630 = vmul.f32 1.0, %v629
  %v631 = vld [vmem:[%s3] sm:$0xff]
  %v632 = vld [vmem:[%s3 + $0x8] sm:$0xff]
  %v633 = vld [vmem:[%s3 + $0x10] sm:$0xff]
  %v634 = vld [vmem:[%s3 + $0x18] sm:$0xff]
  %v636 = vsel %vm423, %v628, 0
  %v639 = vsel %vm423, %v630, 0
  %641 = vmatprep.subr.mxu0 0.0
  %642 = vmatpush1.msra.mxu0 0.0
  %643 = vmatprep.subr.mxu0 0.0
  %644 = vmatpush1.msra.mxu0 0.0
  %645 = vmatprep.subr.mxu0 0.0
  %646 = vmatpush1.msra.mxu0 0.0
  %647 = vmatprep.subr.mxu0 0.0
  %648 = vmatpush1.msra.mxu0 0.0
  %649 = vmatprep.subr.mxu0 0.0
  %650 = vmatpush1.msra.mxu0 0.0
  %651 = vmatprep.subr.mxu0 0.0
  %652 = vmatpush1.msra.mxu0 0.0
  %653 = vmatprep.subr.mxu0 0.0
  %654 = vmatpush1.msra.mxu0 0.0
  %655 = vmatprep.subr.mxu0 0.0
  %656 = vmatpush1.msra.mxu0 0.0
  %657 = vmatprep.subr.mxu0 0.0
  %658 = vmatpush1.msra.mxu0 0.0
  %659 = vmatprep.subr.mxu0 0.0
  %660 = vmatpush1.msra.mxu0 0.0
  %661 = vmatprep.subr.mxu0 0.0
  %662 = vmatpush1.msra.mxu0 0.0
  %663 = vmatprep.subr.mxu0 0.0
  %664 = vmatpush1.msra.mxu0 0.0
  %665 = vmatprep.subr.mxu0 0.0
  %666 = vmatpush1.msra.mxu0 %v634
  %667 = vmatprep.subr.mxu0 0.0
  %668 = vmatpush1.msra.mxu0 %v633
  %669 = vmatprep.subr.mxu0 0.0
  %670 = vmatpush1.msra.mxu0 %v632
  %671 = vmatprep.subr.mxu0 0.0
  %672 = vmatpush1.msra.mxu0 %v631
  %673 = vmatprep.subr.mxu0 0.0
  %674 = vmatpush2.msra.mxu0 0.0
  %675 = vmatprep.subr.mxu0 0.0
  %676 = vmatpush2.msra.mxu0 0.0
  %677 = vmatprep.subr.mxu0 0.0
  %678 = vmatpush2.msra.mxu0 0.0
  %679 = vmatprep.subr.mxu0 0.0
  %680 = vmatpush2.msra.mxu0 0.0
  %681 = vmatprep.subr.mxu0 0.0
  %682 = vmatpush2.msra.mxu0 0.0
  %683 = vmatprep.subr.mxu0 0.0
  %684 = vmatpush2.msra.mxu0 0.0
  %685 = vmatprep.subr.mxu0 0.0
  %686 = vmatpush2.msra.mxu0 0.0
  %687 = vmatprep.subr.mxu0 0.0
  %688 = vmatpush2.msra.mxu0 0.0
  %689 = vmatprep.subr.mxu0 0.0
  %690 = vmatpush2.msra.mxu0 0.0
  %691 = vmatprep.subr.mxu0 0.0
  %692 = vmatpush2.msra.mxu0 0.0
  %693 = vmatprep.subr.mxu0 0.0
  %694 = vmatpush2.msra.mxu0 0.0
  %695 = vmatprep.subr.mxu0 0.0
  %696 = vmatpush2.msra.mxu0 0.0
  %697 = vmatprep.subr.mxu0 0.0
  %698 = vmatpush2.msra.mxu0 0.0
  %699 = vmatprep.subr.mxu0 0.0
  %700 = vmatpush2.msra.mxu0 0.0
  %701 = vmatprep.subr.mxu0 0.0
  %702 = vmatpush2.msra.mxu0 0.0
  %703 = vmatprep.subr.mxu0 0.0
  %704 = vmatpush2.msra.mxu0 0.0
  %705 = vmatprep.mubr.f32.mxu0 0.0
  %706 = vmatmul.mubr.f32.gmra.mxu0 %v636
  %v707 = vpop.f32.mrf.mxu0
  %v708 = vadd.f32 0.0, %v707
  %v709 = vpop.f32.mrf.mxu0
  %710 = vmatprep.mubr.f32.mxu0 0.0
  %711 = vmatmul.mubr.f32.gmra.mxu0 %v639
  %v712 = vpop.f32.mrf.mxu0
  %v713 = vadd.f32 0.0, %v712
  %v714 = vpop.f32.mrf.mxu0
  %715 = vdwg.mxu0
  %v716 = vsel %vm423, %v708, 0.0
  %v717 = vsel %vm423, %v713, 0.0
  %v718 = vadd.f32 %v716, %v717
  %v719 = vrot.slane %v718, 4
  %v720 = vadd.f32 %v718, %v719
  %v721 = vrot.slane %v720, 2
  %v722 = vadd.f32 %v720, %v721
  %v723 = vrot.slane %v722, 1
  %v724 = vadd.f32 %v722, %v723
  %v725 = vmul.f32 %v724, %v147
  %v726 = vsub.f32 %v708, %v725
  %v727 = vsub.f32 %v713, %v725
  %v728 = vmul.f32 %v726, %v726
  %v729 = vmul.f32 %v727, %v727
  %v730 = vsel %vm423, %v728, 0.0
  %v731 = vsel %vm423, %v729, 0.0
  %v732 = vadd.f32 %v730, %v731
  %v733 = vrot.slane %v732, 4
  %v734 = vadd.f32 %v732, %v733
  %v735 = vrot.slane %v734, 2
  %v736 = vadd.f32 %v734, %v735
  %v737 = vrot.slane %v736, 1
  %v738 = vadd.f32 %v736, %v737
  %v739 = vmul.f32 %v738, %v147
  %v740 = vld [vmem:[%s8 + $0x4] sm:$0x1]
  %v741 = vld [vmem:[%s8 + $0x5] sm:$0x1]
  %v742 = vadd.f32 %v739, 1e-05
  %v743 = vrsqrt.pop %v742
  %v744 = vmul.f32 %v726, %v743
  %v745 = vmul.f32 %v727, %v743
  %v746 = vlaneseq
  %v747 = vshrl.u32 %v746, 7
  %v748 = vsub.s32 0, %v747
  %v749 = vrot.slane %v740, %v748
  %v750 = vmul.f32 %v744, %v749
  %v751 = vmul.f32 %v745, %v749
  %v752 = vlaneseq
  %v753 = vshrl.u32 %v752, 7
  %v754 = vsub.s32 0, %v753
  %v755 = vrot.slane %v741, %v754
  %v756 = vadd.f32 %v750, %v755
  %v757 = vadd.f32 %v751, %v755
  %v758 = vxor.u32 %v756, 2147483648
  %v759 = vxor.u32 %v757, 2147483648
  %v760 = vmul.f32 %v758, 1.442695
  %v761 = vpow.pop %v760
  %v762 = vmul.f32 %v759, 1.442695
  %v763 = vpow.pop %v762
  %v764 = vadd.f32 %v761, 1.0
  %v765 = vadd.f32 %v763, 1.0
  %v766 = vrcp.pop %v764
  %v767 = vmul.f32 1.0, %v766
  %v768 = vrcp.pop %v765
  %v769 = vmul.f32 1.0, %v768
  %v770 = vld [vmem:[%s4] sm:$0xff]
  %v771 = vld [vmem:[%s4 + $0x8] sm:$0xff]
  %v772 = vld [vmem:[%s4 + $0x10] sm:$0xff]
  %v773 = vld [vmem:[%s4 + $0x18] sm:$0xff]
  %v775 = vsel %vm423, %v767, 0
  %v778 = vsel %vm423, %v769, 0
  %780 = vmatprep.subr.mxu0 0.0
  %781 = vmatpush1.msra.mxu0 0.0
  %782 = vmatprep.subr.mxu0 0.0
  %783 = vmatpush1.msra.mxu0 0.0
  %784 = vmatprep.subr.mxu0 0.0
  %785 = vmatpush1.msra.mxu0 0.0
  %786 = vmatprep.subr.mxu0 0.0
  %787 = vmatpush1.msra.mxu0 0.0
  %788 = vmatprep.subr.mxu0 0.0
  %789 = vmatpush1.msra.mxu0 0.0
  %790 = vmatprep.subr.mxu0 0.0
  %791 = vmatpush1.msra.mxu0 0.0
  %792 = vmatprep.subr.mxu0 0.0
  %793 = vmatpush1.msra.mxu0 0.0
  %794 = vmatprep.subr.mxu0 0.0
  %795 = vmatpush1.msra.mxu0 0.0
  %796 = vmatprep.subr.mxu0 0.0
  %797 = vmatpush1.msra.mxu0 0.0
  %798 = vmatprep.subr.mxu0 0.0
  %799 = vmatpush1.msra.mxu0 0.0
  %800 = vmatprep.subr.mxu0 0.0
  %801 = vmatpush1.msra.mxu0 0.0
  %802 = vmatprep.subr.mxu0 0.0
  %803 = vmatpush1.msra.mxu0 0.0
  %804 = vmatprep.subr.mxu0 0.0
  %805 = vmatpush1.msra.mxu0 %v773
  %806 = vmatprep.subr.mxu0 0.0
  %807 = vmatpush1.msra.mxu0 %v772
  %808 = vmatprep.subr.mxu0 0.0
  %809 = vmatpush1.msra.mxu0 %v771
  %810 = vmatprep.subr.mxu0 0.0
  %811 = vmatpush1.msra.mxu0 %v770
  %812 = vmatprep.subr.mxu0 0.0
  %813 = vmatpush2.msra.mxu0 0.0
  %814 = vmatprep.subr.mxu0 0.0
  %815 = vmatpush2.msra.mxu0 0.0
  %816 = vmatprep.subr.mxu0 0.0
  %817 = vmatpush2.msra.mxu0 0.0
  %818 = vmatprep.subr.mxu0 0.0
  %819 = vmatpush2.msra.mxu0 0.0
  %820 = vmatprep.subr.mxu0 0.0
  %821 = vmatpush2.msra.mxu0 0.0
  %822 = vmatprep.subr.mxu0 0.0
  %823 = vmatpush2.msra.mxu0 0.0
  %824 = vmatprep.subr.mxu0 0.0
  %825 = vmatpush2.msra.mxu0 0.0
  %826 = vmatprep.subr.mxu0 0.0
  %827 = vmatpush2.msra.mxu0 0.0
  %828 = vmatprep.subr.mxu0 0.0
  %829 = vmatpush2.msra.mxu0 0.0
  %830 = vmatprep.subr.mxu0 0.0
  %831 = vmatpush2.msra.mxu0 0.0
  %832 = vmatprep.subr.mxu0 0.0
  %833 = vmatpush2.msra.mxu0 0.0
  %834 = vmatprep.subr.mxu0 0.0
  %835 = vmatpush2.msra.mxu0 0.0
  %836 = vmatprep.subr.mxu0 0.0
  %837 = vmatpush2.msra.mxu0 0.0
  %838 = vmatprep.subr.mxu0 0.0
  %839 = vmatpush2.msra.mxu0 0.0
  %840 = vmatprep.subr.mxu0 0.0
  %841 = vmatpush2.msra.mxu0 0.0
  %842 = vmatprep.subr.mxu0 0.0
  %843 = vmatpush2.msra.mxu0 0.0
  %844 = vmatprep.mubr.f32.mxu0 0.0
  %845 = vmatmul.mubr.f32.gmra.mxu0 %v775
  %v846 = vpop.f32.mrf.mxu0
  %v847 = vadd.f32 0.0, %v846
  %v848 = vpop.f32.mrf.mxu0
  %849 = vmatprep.mubr.f32.mxu0 0.0
  %850 = vmatmul.mubr.f32.gmra.mxu0 %v778
  %v851 = vpop.f32.mrf.mxu0
  %v852 = vadd.f32 0.0, %v851
  %v853 = vpop.f32.mrf.mxu0
  %854 = vdwg.mxu0
  %vm855 = vcmask 130048
  %v856 = vsel %vm855, %v847, 0.0
  %v857 = vsel %vm855, %v852, 0.0
  %v858 = vadd.f32 %v856, %v857
  %v859 = vrot.slane %v858, 4
  %v860 = vadd.f32 %v858, %v859
  %v861 = vrot.slane %v860, 2
  %v862 = vadd.f32 %v860, %v861
  %v863 = vrot.slane %v862, 1
  %v864 = vadd.f32 %v862, %v863
  %v865 = vmul.f32 %v864, %v147
  %v866 = vsub.f32 %v847, %v865
  %v867 = vsub.f32 %v852, %v865
  %v868 = vmul.f32 %v866, %v866
  %v869 = vmul.f32 %v867, %v867
  %v870 = vsel %vm855, %v868, 0.0
  %v871 = vsel %vm855, %v869, 0.0
  %v872 = vadd.f32 %v870, %v871
  %v873 = vrot.slane %v872, 4
  %v874 = vadd.f32 %v872, %v873
  %v875 = vrot.slane %v874, 2
  %v876 = vadd.f32 %v874, %v875
  %v877 = vrot.slane %v876, 1
  %v878 = vadd.f32 %v876, %v877
  %v879 = vmul.f32 %v878, %v147
  %v880 = vld [vmem:[%s8 + $0x6] sm:$0x1]
  %v881 = vld [vmem:[%s8 + $0x7] sm:$0x1]
  %v882 = vadd.f32 %v879, 1e-05
  %v883 = vrsqrt.pop %v882
  %v884 = vmul.f32 %v866, %v883
  %v885 = vmul.f32 %v867, %v883
  %v886 = vlaneseq
  %v887 = vshrl.u32 %v886, 7
  %v888 = vsub.s32 0, %v887
  %v889 = vrot.slane %v880, %v888
  %v890 = vmul.f32 %v884, %v889
  %v891 = vmul.f32 %v885, %v889
  %v892 = vlaneseq
  %v893 = vshrl.u32 %v892, 7
  %v894 = vsub.s32 0, %v893
  %v895 = vrot.slane %v881, %v894
  %v896 = vadd.f32 %v890, %v895
  %v897 = vadd.f32 %v891, %v895
  %v898 = vmax.f32 %v896, 0.0
  %v899 = vmax.f32 %v897, 0.0
  %v900 = vld [vmem:[%s5] sm:$0xff]
  %v901 = vld [vmem:[%s5 + $0x8] sm:$0xff]
  %v903 = vsel %vm855, %v898, 0
  %v906 = vsel %vm855, %v899, 0
  %908 = vmatprep.subr.mxu0 0.0
  %909 = vmatpush1.msra.mxu0 0.0
  %910 = vmatprep.subr.mxu0 0.0
  %911 = vmatpush1.msra.mxu0 0.0
  %912 = vmatprep.subr.mxu0 0.0
  %913 = vmatpush1.msra.mxu0 0.0
  %914 = vmatprep.subr.mxu0 0.0
  %915 = vmatpush1.msra.mxu0 0.0
  %916 = vmatprep.subr.mxu0 0.0
  %917 = vmatpush1.msra.mxu0 0.0
  %918 = vmatprep.subr.mxu0 0.0
  %919 = vmatpush1.msra.mxu0 0.0
  %920 = vmatprep.subr.mxu0 0.0
  %921 = vmatpush1.msra.mxu0 0.0
  %922 = vmatprep.subr.mxu0 0.0
  %923 = vmatpush1.msra.mxu0 0.0
  %924 = vmatprep.subr.mxu0 0.0
  %925 = vmatpush1.msra.mxu0 0.0
  %926 = vmatprep.subr.mxu0 0.0
  %927 = vmatpush1.msra.mxu0 0.0
  %928 = vmatprep.subr.mxu0 0.0
  %929 = vmatpush1.msra.mxu0 0.0
  %930 = vmatprep.subr.mxu0 0.0
  %931 = vmatpush1.msra.mxu0 0.0
  %932 = vmatprep.subr.mxu0 0.0
  %933 = vmatpush1.msra.mxu0 0.0
  %934 = vmatprep.subr.mxu0 0.0
  %935 = vmatpush1.msra.mxu0 0.0
  %936 = vmatprep.subr.mxu0 0.0
  %937 = vmatpush1.msra.mxu0 %v901
  %938 = vmatprep.subr.mxu0 0.0
  %939 = vmatpush1.msra.mxu0 %v900
  %940 = vmatprep.subr.mxu0 0.0
  %941 = vmatpush2.msra.mxu0 0.0
  %942 = vmatprep.subr.mxu0 0.0
  %943 = vmatpush2.msra.mxu0 0.0
  %944 = vmatprep.subr.mxu0 0.0
  %945 = vmatpush2.msra.mxu0 0.0
  %946 = vmatprep.subr.mxu0 0.0
  %947 = vmatpush2.msra.mxu0 0.0
  %948 = vmatprep.subr.mxu0 0.0
  %949 = vmatpush2.msra.mxu0 0.0
  %950 = vmatprep.subr.mxu0 0.0
  %951 = vmatpush2.msra.mxu0 0.0
  %952 = vmatprep.subr.mxu0 0.0
  %953 = vmatpush2.msra.mxu0 0.0
  %954 = vmatprep.subr.mxu0 0.0
  %955 = vmatpush2.msra.mxu0 0.0
  %956 = vmatprep.subr.mxu0 0.0
  %957 = vmatpush2.msra.mxu0 0.0
  %958 = vmatprep.subr.mxu0 0.0
  %959 = vmatpush2.msra.mxu0 0.0
  %960 = vmatprep.subr.mxu0 0.0
  %961 = vmatpush2.msra.mxu0 0.0
  %962 = vmatprep.subr.mxu0 0.0
  %963 = vmatpush2.msra.mxu0 0.0
  %964 = vmatprep.subr.mxu0 0.0
  %965 = vmatpush2.msra.mxu0 0.0
  %966 = vmatprep.subr.mxu0 0.0
  %967 = vmatpush2.msra.mxu0 0.0
  %968 = vmatprep.subr.mxu0 0.0
  %969 = vmatpush2.msra.mxu0 0.0
  %970 = vmatprep.subr.mxu0 0.0
  %971 = vmatpush2.msra.mxu0 0.0
  %972 = vmatprep.mubr.f32.mxu0 0.0
  %973 = vmatmul.mubr.f32.gmra.mxu0 %v903
  %v974 = vpop.f32.mrf.mxu0
  %v975 = vadd.f32 0.0, %v974
  %v976 = vpop.f32.mrf.mxu0
  %977 = vmatprep.mubr.f32.mxu0 0.0
  %978 = vmatmul.mubr.f32.gmra.mxu0 %v906
  %v979 = vpop.f32.mrf.mxu0
  %v980 = vadd.f32 0.0, %v979
  %v981 = vpop.f32.mrf.mxu0
  %982 = vdwg.mxu0
  %v983 = vadd.f32 %v975, %v980
  %v984 = vrot.slane %v983, 4
  %v985 = vadd.f32 %v983, %v984
  %v986 = vrot.slane %v985, 2
  %v987 = vadd.f32 %v985, %v986
  %v988 = vrot.slane %v987, 1
  %v989 = vadd.f32 %v987, %v988
  %v990 = vmul.f32 %v989, %v147
  %v991 = vsub.f32 %v975, %v990
  %v992 = vsub.f32 %v980, %v990
  %v993 = vmul.f32 %v991, %v991
  %v994 = vmul.f32 %v992, %v992
  %v995 = vadd.f32 %v993, %v994
  %v996 = vrot.slane %v995, 4
  %v997 = vadd.f32 %v995, %v996
  %v998 = vrot.slane %v997, 2
  %v999 = vadd.f32 %v997, %v998
  %v1000 = vrot.slane %v999, 1
  %v1001 = vadd.f32 %v999, %v1000
  %v1002 = vmul.f32 %v1001, %v147
  %v1003 = vld [vmem:[%s8 + $0x8] sm:$0x1]
  %v1004 = vld [vmem:[%s8 + $0x9] sm:$0x1]
  %v1005 = vadd.f32 %v1002, 1e-05
  %v1006 = vrsqrt.pop %v1005
  %v1007 = vmul.f32 %v991, %v1006
  %v1008 = vmul.f32 %v992, %v1006
  %v1009 = vlaneseq
  %v1010 = vshrl.u32 %v1009, 7
  %v1011 = vsub.s32 0, %v1010
  %v1012 = vrot.slane %v1003, %v1011
  %v1013 = vmul.f32 %v1007, %v1012
  %v1014 = vmul.f32 %v1008, %v1012
  %v1015 = vlaneseq
  %v1016 = vshrl.u32 %v1015, 7
  %v1017 = vsub.s32 0, %v1016
  %v1018 = vrot.slane %v1004, %v1017
  %v1019 = vadd.f32 %v1013, %v1018
  %v1020 = vadd.f32 %v1014, %v1018
  %v1021 = vxor.u32 %v1019, 2147483648
  %v1022 = vxor.u32 %v1020, 2147483648
  %v1023 = vmul.f32 %v1021, 1.442695
  %v1024 = vpow.pop %v1023
  %v1025 = vmul.f32 %v1022, 1.442695
  %v1026 = vpow.pop %v1025
  %v1027 = vadd.f32 %v1024, 1.0
  %v1028 = vadd.f32 %v1026, 1.0
  %v1029 = vrcp.pop %v1027
  %v1030 = vmul.f32 1.0, %v1029
  %v1031 = vrcp.pop %v1028
  %v1032 = vmul.f32 1.0, %v1031
  %1033 = vst [vmem:[%s9] sm:$0xff] %v1030
  %1034 = vst [vmem:[%s9 + $0x8] sm:$0xff] %v1032
  // Predicated region
  $region38: #{solution_model_forward.1} parent=0 // pred_check
    _
  $region39: #{solution_model_forward.1} parent=0 // pred_check_branch
    %1036 = sbr.rel (0) target = $region41
  $region40: #{solution_model_forward.1} parent=0 // pred_region
    _
  $region41: #{solution_model_forward.1} parent=0 // pred_fallthru
    _
  // Predicated region
  $region42: #{solution_model_forward.1} parent=0 // pred_check
    _
  $region43: #{solution_model_forward.1} parent=0 // pred_check_branch
    %1038 = sbr.rel (0) target = $region45
  $region44: #{solution_model_forward.1} parent=0 // pred_region
    _
  $region45: #{solution_model_forward.1} parent=0 // pred_fallthru
    _

</llo_original>
